<compile_context>
chip_gen: v7x
topology: tpu7x:2x2x1
jax: 0.10.0
libtpu: 0.0.40
codegen_flags: <defaults>
</compile_context>

<pallas_src>
import jax
import jax.numpy as jnp
from jax.experimental import pallas as pl
from jax.experimental.pallas import tpu as pltpu


def _linear_kernel(x_ref, w_ref, b_ref, o_ref):
    # x_ref: [TB, IN]   (VMEM, pipelined)
    # w_ref: [OUT, IN]  (SMEM, PyTorch layout, resident)
    # b_ref: [OUT]      (SMEM, resident)
    # o_ref: [TB, OUT]  (VMEM, pipelined)
    out_f, in_f = w_ref.shape
    tb = x_ref.shape[0]

    lane = jax.lax.broadcasted_iota(jnp.int32, (tb, out_f), 1)
    acc = jnp.zeros((tb, out_f), jnp.float32)
    for j in range(out_f):
        # VPU broadcast-FMA: col_j = sum_k x[:, k] * W[j, k] + b[j]
        col = x_ref[:, 0:1] * w_ref[j, 0]
        for k in range(1, in_f):
            col = col + x_ref[:, k:k + 1] * w_ref[j, k]
        col = col + b_ref[j]
        # Place column j into lane j (pure VPU select, no cross-lane shuffle).
        acc = jnp.where(lane == j, col, acc)
    o_ref[...] = acc.astype(o_ref.dtype)


def dummy_model_forward(inputs, params, *, tile_batch=1024):
    """JAX/Pallas equivalent of DummyModel.forward.

    inputs: {'input': [batch, 2] float32}
    params: {'weight': [3, 2], 'bias': [3]}   (PyTorch nn.Linear layout)
    returns: {'output': [batch, 3] float32}
    """
    x = inputs["input"]
    w = params["weight"]        # [out_f, in_f] -> SMEM, untouched
    b = params["bias"]          # [out_f]       -> SMEM, untouched

    batch, in_f = x.shape
    out_f = w.shape[0]

    if batch <= tile_batch:
        tb = batch                       # full extent (satisfies tiling rule)
    else:
        tb = (tile_batch // 8) * 8       # multiple of 8 sublanes
    grid = (pl.cdiv(batch, tb),)

    out = pl.pallas_call(
        _linear_kernel,
        out_shape=jax.ShapeDtypeStruct((batch, out_f), x.dtype),
        grid=grid,
        in_specs=[
            pl.BlockSpec((tb, in_f), lambda i: (i, 0)),            # x tiles (pipelined)
            pl.BlockSpec(memory_space=pltpu.MemorySpace.SMEM),     # weight (resident)
            pl.BlockSpec(memory_space=pltpu.MemorySpace.SMEM),     # bias (resident)
        ],
        out_specs=pl.BlockSpec((tb, out_f), lambda i: (i, 0)),
        compiler_params=pltpu.CompilerParams(
            dimension_semantics=("parallel",),
            vmem_limit_bytes=32 * 1024 * 1024,
        ),
    )(x, w, b)

    return {"output": out}


def init_params(key):
    """Deterministic init matching nn.Linear(2, 3) shapes."""
    in_f, out_f = 2, 3
    k_w, k_b = jax.random.split(key)
    bound = 1.0 / jnp.sqrt(in_f)
    weight = jax.random.uniform(k_w, (out_f, in_f), jnp.float32, -bound, bound)
    bias = jax.random.uniform(k_b, (out_f,), jnp.float32, -bound, bound)
    return {"weight": weight, "bias": bias}


if __name__ == "__main__":
    key = jax.random.PRNGKey(0)
    k_params, k_x = jax.random.split(key)

    params = init_params(k_params)
    x = jax.random.normal(k_x, (8, 2), jnp.float32)   # batch=8, in_features=2

    out = dummy_model_forward({"input": x}, params)
    jax.block_until_ready(out["output"])

    # Sanity check against plain JAX reference.
    ref = x @ params["weight"].T + params["bias"]
    assert out["output"].shape == (8, 3)
    assert jnp.allclose(out["output"], ref, atol=1e-5), "mismatch vs reference"

    print("KERNEL_OK")
</pallas_src>

<mosaic_0001>
module attributes {stable_mosaic.version = 11 : i64} {
  func.func @_linear_kernel(%arg0: i32, %arg1: memref<8x2xf32, #tpu.memory_space<vmem>>, %arg2: memref<3x2xf32, #tpu.memory_space<smem>>, %arg3: memref<3xf32, #tpu.memory_space<smem>>, %arg4: memref<8x3xf32, #tpu.memory_space<vmem>>) attributes {dimension_semantics = [#tpu.dimension_semantics<parallel>], iteration_bounds = array<i64: 1>, scalar_prefetch = 0 : i64, scratch_operands = 0 : i64, tpu.core_type = #tpu.core_type<tc>, window_params = [{transform_indices = @transform_0, window_bounds = array<i64: 8, 2>}, {transform_indices = @transform_1, window_bounds = array<i64: 3, 2>}, {transform_indices = @transform_2, window_bounds = array<i64: 3>}, {transform_indices = @transform_3, window_bounds = array<i64: 8, 3>}]} {
    %0 = tpu.iota {dimensions = array<i32: 1>} : vector<8x3xi32>
    %cst = arith.constant 0.000000e+00 : f32
    %1 = vector.broadcast %cst : f32 to vector<8x3xf32>
    %c0 = arith.constant 0 : index
    %c0_0 = arith.constant 0 : index
    %2 = vector.load %arg1[%c0, %c0_0] : memref<8x2xf32, #tpu.memory_space<vmem>>, vector<8x1xf32>
    %c0_1 = arith.constant 0 : index
    %c0_2 = arith.constant 0 : index
    %3 = memref.load %arg2[%c0_1, %c0_2] : memref<3x2xf32, #tpu.memory_space<smem>>
    %4 = vector.broadcast %3 : f32 to vector<8x1xf32>
    %5 = arith.mulf %2, %4 : vector<8x1xf32>
    %c0_3 = arith.constant 0 : index
    %c1 = arith.constant 1 : index
    %6 = vector.load %arg1[%c0_3, %c1] : memref<8x2xf32, #tpu.memory_space<vmem>>, vector<8x1xf32>
    %c0_4 = arith.constant 0 : index
    %c1_5 = arith.constant 1 : index
    %7 = memref.load %arg2[%c0_4, %c1_5] : memref<3x2xf32, #tpu.memory_space<smem>>
    %8 = vector.broadcast %7 : f32 to vector<8x1xf32>
    %9 = arith.mulf %6, %8 : vector<8x1xf32>
    %10 = arith.addf %5, %9 : vector<8x1xf32>
    %c0_6 = arith.constant 0 : index
    %11 = memref.load %arg3[%c0_6] : memref<3xf32, #tpu.memory_space<smem>>
    %12 = vector.broadcast %11 : f32 to vector<8x1xf32>
    %13 = arith.addf %10, %12 : vector<8x1xf32>
    %c0_i32 = arith.constant 0 : i32
    %14 = vector.broadcast %c0_i32 : i32 to vector<8x3xi32>
    %15 = arith.cmpi eq, %0, %14 : vector<8x3xi32>
    %16 = vector.shape_cast %13 : vector<8x1xf32> to vector<8x1xf32>
    %17 = vector.broadcast %16 : vector<8x1xf32> to vector<8x3xf32>
    %18 = arith.select %15, %17, %1 : vector<8x3xi1>, vector<8x3xf32>
    %c0_7 = arith.constant 0 : index
    %c0_8 = arith.constant 0 : index
    %19 = vector.load %arg1[%c0_7, %c0_8] : memref<8x2xf32, #tpu.memory_space<vmem>>, vector<8x1xf32>
    %c1_9 = arith.constant 1 : index
    %c0_10 = arith.constant 0 : index
    %20 = memref.load %arg2[%c1_9, %c0_10] : memref<3x2xf32, #tpu.memory_space<smem>>
    %21 = vector.broadcast %20 : f32 to vector<8x1xf32>
    %22 = arith.mulf %19, %21 : vector<8x1xf32>
    %c0_11 = arith.constant 0 : index
    %c1_12 = arith.constant 1 : index
    %23 = vector.load %arg1[%c0_11, %c1_12] : memref<8x2xf32, #tpu.memory_space<vmem>>, vector<8x1xf32>
    %c1_13 = arith.constant 1 : index
    %c1_14 = arith.constant 1 : index
    %24 = memref.load %arg2[%c1_13, %c1_14] : memref<3x2xf32, #tpu.memory_space<smem>>
    %25 = vector.broadcast %24 : f32 to vector<8x1xf32>
    %26 = arith.mulf %23, %25 : vector<8x1xf32>
    %27 = arith.addf %22, %26 : vector<8x1xf32>
    %c1_15 = arith.constant 1 : index
    %28 = memref.load %arg3[%c1_15] : memref<3xf32, #tpu.memory_space<smem>>
    %29 = vector.broadcast %28 : f32 to vector<8x1xf32>
    %30 = arith.addf %27, %29 : vector<8x1xf32>
    %c1_i32 = arith.constant 1 : i32
    %31 = vector.broadcast %c1_i32 : i32 to vector<8x3xi32>
    %32 = arith.cmpi eq, %0, %31 : vector<8x3xi32>
    %33 = vector.shape_cast %30 : vector<8x1xf32> to vector<8x1xf32>
    %34 = vector.broadcast %33 : vector<8x1xf32> to vector<8x3xf32>
    %35 = arith.select %32, %34, %18 : vector<8x3xi1>, vector<8x3xf32>
    %c0_16 = arith.constant 0 : index
    %c0_17 = arith.constant 0 : index
    %36 = vector.load %arg1[%c0_16, %c0_17] : memref<8x2xf32, #tpu.memory_space<vmem>>, vector<8x1xf32>
    %c2 = arith.constant 2 : index
    %c0_18 = arith.constant 0 : index
    %37 = memref.load %arg2[%c2, %c0_18] : memref<3x2xf32, #tpu.memory_space<smem>>
    %38 = vector.broadcast %37 : f32 to vector<8x1xf32>
    %39 = arith.mulf %36, %38 : vector<8x1xf32>
    %c0_19 = arith.constant 0 : index
    %c1_20 = arith.constant 1 : index
    %40 = vector.load %arg1[%c0_19, %c1_20] : memref<8x2xf32, #tpu.memory_space<vmem>>, vector<8x1xf32>
    %c2_21 = arith.constant 2 : index
    %c1_22 = arith.constant 1 : index
    %41 = memref.load %arg2[%c2_21, %c1_22] : memref<3x2xf32, #tpu.memory_space<smem>>
    %42 = vector.broadcast %41 : f32 to vector<8x1xf32>
    %43 = arith.mulf %40, %42 : vector<8x1xf32>
    %44 = arith.addf %39, %43 : vector<8x1xf32>
    %c2_23 = arith.constant 2 : index
    %45 = memref.load %arg3[%c2_23] : memref<3xf32, #tpu.memory_space<smem>>
    %46 = vector.broadcast %45 : f32 to vector<8x1xf32>
    %47 = arith.addf %44, %46 : vector<8x1xf32>
    %c2_i32 = arith.constant 2 : i32
    %48 = vector.broadcast %c2_i32 : i32 to vector<8x3xi32>
    %49 = arith.cmpi eq, %0, %48 : vector<8x3xi32>
    %50 = vector.shape_cast %47 : vector<8x1xf32> to vector<8x1xf32>
    %51 = vector.broadcast %50 : vector<8x1xf32> to vector<8x3xf32>
    %52 = arith.select %49, %51, %35 : vector<8x3xi1>, vector<8x3xf32>
    %c0_24 = arith.constant 0 : index
    %c0_25 = arith.constant 0 : index
    %53 = vector.load %arg4[%c0_24, %c0_25] : memref<8x3xf32, #tpu.memory_space<vmem>>, vector<8x3xf32>
    tpu.vector_store %arg4[%c0_24, %c0_25], %52 {strides = array<i32>} : memref<8x3xf32, #tpu.memory_space<vmem>>, vector<8x3xf32>,
    return
  }
  func.func @transform_0(%arg0: i32) -> (i32, i32) {
    %c0_i32 = arith.constant 0 : i32
    %c0_i32_0 = arith.constant 0 : i32
    return %arg0, %c0_i32 : i32, i32
  }
  func.func @transform_1(%arg0: i32) -> (i32, i32) {
    %c0_i32 = arith.constant 0 : i32
    %c0_i32_0 = arith.constant 0 : i32
    %c0_i32_1 = arith.constant 0 : i32
    return %c0_i32, %c0_i32_0 : i32, i32
  }
  func.func @transform_2(%arg0: i32) -> i32 {
    %c0_i32 = arith.constant 0 : i32
    %c0_i32_0 = arith.constant 0 : i32
    return %c0_i32 : i32
  }
  func.func @transform_3(%arg0: i32) -> (i32, i32) {
    %c0_i32 = arith.constant 0 : i32
    %c0_i32_0 = arith.constant 0 : i32
    return %arg0, %c0_i32 : i32, i32
  }
}

</mosaic_0001>

<llo_original>
// kernel: tpu_custom_call.1
$region0: #{tpu_custom_call.1}
  #allocation0 [shape = 'u32[]', space=smem, size = 0x4, offset = 0x4, fixed_abs, tag = 'smem constant byte address 0x4 - core index']
  #allocation1 [shape = 'u32[144,128]{1,0:T(1,128)}', space=vmem, size = 0x12000, scoped, tag = 'internal scratch']
  %s0 = inlined_call_operand.vmem [shape: f32[8,2], index: 0, kind: input, shape index: {}]
  %s1 = inlined_call_operand.vmem [shape: f32[3,2], index: 1, kind: input, shape index: {}]
  %s2 = inlined_call_operand.vmem [shape: f32[3], index: 2, kind: input, shape index: {}]
  %s3 = inlined_call_operand.vmem [shape: f32[8,3], index: 3, kind: output, shape index: {}]
  %s4 = sld [smem:[#allocation0]]
  $region30: #{tpu_custom_call.1} parent=0
    _
  %s6 = ssub.s32 1, %s4
  %s7 = scalar_select 0, %s6, %s4
  $region1: #{tpu_custom_call.1} parent=0
    #allocation2 [shape = 'u8[2048]{0}', space=smem, size = 0x800, scoped, tag = 'input window, operand 1, single buffered']
    #allocation3 [shape = 's32[1]{0}', space=sflag, size = 0x4, scoped, tag = 'scoped memory for tpu_custom_call.1']
    #allocation4 [shape = 'u8[512]{0}', space=smem, size = 0x200, scoped, tag = 'input window, operand 2, single buffered']
    #allocation5 [shape = 's32[1]{0}', space=sflag, size = 0x4, scoped, tag = 'scoped memory for tpu_custom_call.1']
    %8 = vsyncpa [#allocation3], 0
    %9 = vsyncpa [#allocation5], 0
    // Predicated region
    $region2: #{tpu_custom_call.1} parent=1 // pred_check
      _
    $region3: #{tpu_custom_call.1} parent=1 // pred_check_branch
      %11 = sbr.rel (0) target = $region5
    $region4: #{tpu_custom_call.1} parent=1 // pred_region
      _
    $region5: #{tpu_custom_call.1} parent=1 // pred_fallthru
      _
    // Predicated region
    $region6: #{tpu_custom_call.1} parent=1 // pred_check
      _
    $region7: #{tpu_custom_call.1} parent=1 // pred_check_branch
      %13 = sbr.rel (0) target = $region9
    $region8: #{tpu_custom_call.1} parent=1 // pred_region
      %s15 = ssub.s32 64, 64
      %16 = vsyncadd [#allocation3], %s15
      %s18 = sshll.u32 %s1, 4
      %s19 = int_to_ptr.vmem [resolvable:$true] %s18
      %21 = dma.vmem_to_smem %s19, 64, [#allocation2], [#allocation3]
    $region9: #{tpu_custom_call.1} parent=1 // pred_fallthru
      _
    // Predicated region
    $region10: #{tpu_custom_call.1} parent=1 // pred_check
      _
    $region11: #{tpu_custom_call.1} parent=1 // pred_check_branch
      %23 = sbr.rel (0) target = $region13
    $region12: #{tpu_custom_call.1} parent=1 // pred_region
      %s25 = ssub.s32 16, 16
      %26 = vsyncadd [#allocation5], %s25
      %s28 = sshll.u32 %s2, 4
      %s29 = int_to_ptr.vmem [resolvable:$true] %s28
      %31 = dma.vmem_to_smem %s29, 16, [#allocation4], [#allocation5]
    $region13: #{tpu_custom_call.1} parent=1 // pred_fallthru
      _
    // Predicated region
    $region14: #{tpu_custom_call.1} parent=1 // pred_check
      _
    $region15: #{tpu_custom_call.1} parent=1 // pred_check_branch
      %33 = sbr.rel (0) target = $region17
    $region16: #{tpu_custom_call.1} parent=1 // pred_region
      %34 = dma.done [#allocation3], 64
    $region17: #{tpu_custom_call.1} parent=1 // pred_fallthru
      _
    // Predicated region
    $region18: #{tpu_custom_call.1} parent=1 // pred_check
      _
    $region19: #{tpu_custom_call.1} parent=1 // pred_check_branch
      %36 = sbr.rel (0) target = $region21
    $region20: #{tpu_custom_call.1} parent=1 // pred_region
      %37 = dma.done [#allocation5], 16
    $region21: #{tpu_custom_call.1} parent=1 // pred_fallthru
      _
    %38 = sfence
    %v39 = vlaneseq
    %v40 = vand.u32 %v39, 127
    %v41 = vld [vmem:[%s0] sm:$0xff]
    %s42 = sld [smem:[#allocation2]]
    %v43 = vstv %s42
    %v44 = vmul.f32 %v41, %v43
    %s45 = sld [smem:[#allocation2 + $0x1]]
    %v46 = vstv %s45
    %v47 = vmul.f32 %v41, %v46
    %49 = vrot.lane.b32.xlu0 %v47, 127
    %v50 = vpop.permute.xlu0 %49
    %v52 = vadd.f32 %v44, %v50
    %s53 = sld [smem:[#allocation4]]
    %v54 = vstv %s53
    %v55 = vadd.f32 %v52, %v54
    %vm56 = vcmp.eq.s32.totalorder %v40, 0
    %58 = vset.pattern.permute.xlu0 0
    %59 = vperm.xlu0 %58, %v55
    %v60 = vpop.permute.xlu0 %59
    %v62 = vsel %vm56, %v60, 0.0
    %s63 = sld [smem:[#allocation2 + $0x80]]
    %v64 = vstv %s63
    %v65 = vmul.f32 %v41, %v64
    %s66 = sld [smem:[#allocation2 + $0x81]]
    %v67 = vstv %s66
    %v68 = vmul.f32 %v41, %v67
    %70 = vrot.lane.b32.xlu0 %v68, 127
    %v71 = vpop.permute.xlu0 %70
    %v73 = vadd.f32 %v65, %v71
    %s74 = sld [smem:[#allocation4 + $0x1]]
    %v75 = vstv %s74
    %v76 = vadd.f32 %v73, %v75
    %vm77 = vcmp.eq.s32.totalorder %v40, 1
    %79 = vset.pattern.permute.xlu0 0
    %80 = vperm.xlu0 %79, %v76
    %v81 = vpop.permute.xlu0 %80
    %v83 = vsel %vm77, %v81, %v62
    %s84 = sld [smem:[#allocation2 + $0x100]]
    %v85 = vstv %s84
    %v86 = vmul.f32 %v41, %v85
    %s87 = sld [smem:[#allocation2 + $0x101]]
    %v88 = vstv %s87
    %v89 = vmul.f32 %v41, %v88
    %91 = vrot.lane.b32.xlu0 %v89, 127
    %v92 = vpop.permute.xlu0 %91
    %v94 = vadd.f32 %v86, %v92
    %s95 = sld [smem:[#allocation4 + $0x2]]
    %v96 = vstv %s95
    %v97 = vadd.f32 %v94, %v96
    %vm98 = vcmp.eq.s32.totalorder %v40, 2
    %100 = vset.pattern.permute.xlu0 0
    %101 = vperm.xlu0 %100, %v97
    %v102 = vpop.permute.xlu0 %101
    %v104 = vsel %vm98, %v102, %v83
    %vm105 = vcmask 23552
    %106 = vst.msk [vmem:[%s3] sm:$0xff] %vm105, %v104
    // Predicated region
    $region22: #{tpu_custom_call.1} parent=1 // pred_check
      _
    $region23: #{tpu_custom_call.1} parent=1 // pred_check_branch
      %108 = sbr.rel (0) target = $region25
    $region24: #{tpu_custom_call.1} parent=1 // pred_region
      _
    $region25: #{tpu_custom_call.1} parent=1 // pred_fallthru
      _
    // Predicated region
    $region26: #{tpu_custom_call.1} parent=1 // pred_check
      _
    $region27: #{tpu_custom_call.1} parent=1 // pred_check_branch
      %110 = sbr.rel (0) target = $region29
    $region28: #{tpu_custom_call.1} parent=1 // pred_region
      _
    $region29: #{tpu_custom_call.1} parent=1 // pred_fallthru
      _
    %111 = vsyncpa [#allocation3], 1
    %112 = vsyncpa [#allocation5], 1

</llo_original>
